<compile_context>
chip_gen: v7x
topology: tpu7x:2x2x1
jax: 0.10.0
libtpu: 0.0.40
codegen_flags: <defaults>
</compile_context>

<pallas_src>
import functools

import jax
import jax.numpy as jnp
import numpy as np
from jax.experimental import pallas as pl
from jax.experimental.pallas import tpu as pltpu

FEAT = 512                 # resnet18 feature width after `fc = nn.Identity()`
FEAT2 = 2 * FEAT           # 1024 = width of the concatenated features
NB_CLASSES = 3             # nn.Linear(1024, nb_classes=3)
OUT_PAD = 128              # lane-dense padded output width (slice [:, :3] outside)


# ---------------------------------------------------------------------------
# Fused kernel: (mean-pool + projectA|B + ReLU + classifier) for one batch tile.
# ---------------------------------------------------------------------------
def fused_ensemble_kernel(x_ref, wf_ref, bf_ref, wc_ref, bc_ref, o_ref, *, inv_hw):
    # x_ref : (bn, C, HW) f32         wf_ref: (C, 1024)   bf_ref: (1, 1024) f32
    # wc_ref: (1024, OUT_PAD)         bc_ref: (1, OUT_PAD) f32
    # o_ref : (bn, OUT_PAD) f32
    # Global mean-pool in f32 (XLU lane reduce) — keeps the weight at (C,1024).
    pooled = jnp.sum(x_ref[...], axis=-1) * inv_hw                      # (bn, C) f32
    feat = jnp.dot(pooled.astype(wf_ref.dtype), wf_ref[...],
                   preferred_element_type=jnp.float32) + bf_ref[...]    # (bn, 1024) f32
    # Backbone ReLU (outputs non-negative) -> F.relu(cat(x1, x2)) is then a
    # no-op, so a single ReLU here preserves the module's forward semantics.
    feat = jnp.maximum(feat, 0.0)
    out = jnp.dot(feat.astype(wc_ref.dtype), wc_ref[...],
                  preferred_element_type=jnp.float32) + bc_ref[...]     # (bn, OUT_PAD)
    o_ref[...] = out.astype(o_ref.dtype)


# ---------------------------------------------------------------------------
# Parameter preparation (done once, outside the hot path).
# ---------------------------------------------------------------------------
def prepare_fused_params(params, weight_dtype=jnp.float32):
    # Concatenate the two backbone projections -> (C, 1024).  NOTE: weights are
    # stored pre-transposed as (in, out); a PyTorch nn.Linear weight (out, in)
    # must be transposed before use.
    w_cat = jnp.concatenate([params["wA"], params["wB"]],
                            axis=1).astype(weight_dtype)                # (C, 1024)
    b_cat = jnp.concatenate([params["bA"], params["bB"]],
                            axis=1).astype(jnp.float32)                 # (1, 1024)
    # Classifier, zero-padded to a lane-dense 128-wide output slab.
    w_cls = jnp.zeros((FEAT2, OUT_PAD), weight_dtype)
    w_cls = w_cls.at[:, :NB_CLASSES].set(params["w_cls"].astype(weight_dtype))
    b_cls = jnp.zeros((1, OUT_PAD), jnp.float32)
    b_cls = b_cls.at[:, :NB_CLASSES].set(params["b_cls"].astype(jnp.float32))
    return w_cat, b_cat, w_cls, b_cls


# ---------------------------------------------------------------------------
# Generation-aware tile sizing.
# ---------------------------------------------------------------------------
def _vmem_capacity_bytes():
    try:
        return int(pltpu.get_tpu_info().vmem_capacity_bytes)
    except Exception:
        return 64 << 20   # conservative fallback (v7x per-TC VMEM)


def _pick_bn(n, c, hw, itemsize):
    vmem_cap = _vmem_capacity_bytes()
    # Per-row VMEM cost of a batch tile: double-buffered f32 x rows, double-
    # buffered output rows, plus f32 in-kernel intermediates (pooled/feat/out).
    per_row = 2 * c * hw * 4 + 2 * OUT_PAD * 4 + (c + FEAT2 + 2 * OUT_PAD) * 4
    weight_bytes = (c * FEAT2 + FEAT2 * OUT_PAD) * itemsize + (FEAT2 + OUT_PAD) * 4
    budget = int(vmem_cap * 0.55) - weight_bytes - (4 << 20)
    target = max(64, min(512, budget // max(per_row, 1)))
    target = max(8, (target // 8) * 8)
    if n <= target:
        # Keep >= 2 grid steps when the batch permits (v7x dual-TC / megacore),
        # with an 8-aligned tile; otherwise a single full-extent block.
        half = ((pl.cdiv(n, 2) + 7) // 8) * 8
        if n > 8 and half < n:
            return half
        return n
    return target


# ---------------------------------------------------------------------------
# Forward pass.
# ---------------------------------------------------------------------------
@functools.partial(jax.jit, static_argnames=("block_n",))
def my_ensemble_forward(x, w_cat, b_cat, w_cls, b_cls, *, block_n=None):
    n, c, h, w = x.shape
    hw = h * w
    x3 = x.reshape(n, c, hw)   # merge of contiguous trailing dims: free, no copy
    itemsize = jnp.dtype(w_cat.dtype).itemsize

    bn = block_n if block_n is not None else _pick_bn(n, c, hw, itemsize)
    bn = min(int(bn), n)
    if bn != n:
        bn = max(8, (bn // 8) * 8)
    grid = (pl.cdiv(n, bn),)

    vmem_cap = _vmem_capacity_bytes()
    need = (2 * bn * c * hw * 4                          # double-buffered x tile (f32)
            + 2 * bn * OUT_PAD * 4                       # double-buffered out tile
            + (c * FEAT2 + FEAT2 * OUT_PAD) * itemsize   # single-buffered weights
            + (FEAT2 + OUT_PAD) * 4                      # single-buffered biases
            + bn * (c + FEAT2 + OUT_PAD) * 4             # in-kernel f32 intermediates
            + (4 << 20))                                 # compiler scratch headroom
    vmem_limit = int(min(max(need * 3 // 2, 16 << 20), int(vmem_cap * 0.85)))

    cost = pl.CostEstimate(
        flops=n * c * hw                      # pooling adds
              + 2 * n * c * FEAT2             # fused backbone projections
              + 2 * n * FEAT2 * OUT_PAD,      # padded classifier
        transcendentals=0,
        bytes_accessed=n * c * hw * 4
                       + (c * FEAT2 + FEAT2 * OUT_PAD) * itemsize
                       + (FEAT2 + OUT_PAD) * 4
                       + n * OUT_PAD * 4,
    )

    out_padded = pl.pallas_call(
        functools.partial(fused_ensemble_kernel, inv_hw=1.0 / float(hw)),
        out_shape=jax.ShapeDtypeStruct((n, OUT_PAD), jnp.float32),
        grid_spec=pltpu.PrefetchScalarGridSpec(
            num_scalar_prefetch=0,
            grid=grid,
            in_specs=[
                pl.BlockSpec((bn, c, hw), lambda i: (i, 0, 0)),           # x tile
                pl.BlockSpec((c, FEAT2), lambda i: (0, 0),
                             pipeline_mode=pl.Buffered(1)),               # fused backbone W
                pl.BlockSpec((1, FEAT2), lambda i: (0, 0),
                             pipeline_mode=pl.Buffered(1)),               # fused backbone b
                pl.BlockSpec((FEAT2, OUT_PAD), lambda i: (0, 0),
                             pipeline_mode=pl.Buffered(1)),               # padded classifier W
                pl.BlockSpec((1, OUT_PAD), lambda i: (0, 0),
                             pipeline_mode=pl.Buffered(1)),               # padded classifier b
            ],
            out_specs=pl.BlockSpec((bn, OUT_PAD), lambda i: (i, 0)),
        ),
        compiler_params=pltpu.CompilerParams(
            dimension_semantics=("parallel",),
            vmem_limit_bytes=vmem_limit,
        ),
        cost_estimate=cost,
    )(x3, w_cat, b_cat, w_cls, b_cls)

    return out_padded[:, :NB_CLASSES]


def init_params(key, in_channels):
    ks = jax.random.split(key, 6)
    s = 0.05
    return {
        "wA": s * jax.random.normal(ks[0], (in_channels, FEAT), jnp.float32),
        "bA": s * jax.random.normal(ks[1], (1, FEAT), jnp.float32),
        "wB": s * jax.random.normal(ks[2], (in_channels, FEAT), jnp.float32),
        "bB": s * jax.random.normal(ks[3], (1, FEAT), jnp.float32),
        # nn.Linear(1024, 3): weight stored here pre-transposed as (in, out)
        "w_cls": s * jax.random.normal(ks[4], (2 * FEAT, NB_CLASSES), jnp.float32),
        "b_cls": s * jax.random.normal(ks[5], (1, NB_CLASSES), jnp.float32),
    }


if __name__ == "__main__":
    key = jax.random.PRNGKey(0)
    k_x, k_p = jax.random.split(key)

    N, C, H, W = 2, 4, 16, 16
    x = jax.random.normal(k_x, (N, C, H, W), jnp.float32)
    params = init_params(k_p, C)

    # Pure-JAX reference faithful to the module wiring (with the stand-in backbone).
    def ref(xi, p):
        pooled = xi.reshape(xi.shape[0], xi.shape[1], -1).mean(-1)
        x1 = jnp.maximum(pooled @ p["wA"] + p["bA"], 0.0)
        x2 = jnp.maximum(pooled @ p["wB"] + p["bB"], 0.0)
        cat = jnp.concatenate((x1, x2), axis=1)
        return jnp.maximum(cat, 0.0) @ p["w_cls"] + p["b_cls"]

    expected = np.asarray(ref(x, params))

    # f32 path.
    fused_f32 = prepare_fused_params(params, jnp.float32)
    out = jax.block_until_ready(my_ensemble_forward(x, *fused_f32))
    assert out.shape == (N, NB_CLASSES) and out.dtype == jnp.float32
    np.testing.assert_allclose(np.asarray(out), expected, rtol=2e-2, atol=2e-3)

    # bf16-weight path: x stays f32 in HBM, pooling in f32, cast in-kernel.
    fused_bf16 = prepare_fused_params(params, jnp.bfloat16)
    out_bf16 = jax.block_until_ready(my_ensemble_forward(x, *fused_bf16))
    np.testing.assert_allclose(np.asarray(out_bf16), expected, rtol=5e-2, atol=1e-2)

    # Ragged-batch path: no wrapper-side padding, >=2 grid steps, masked last block.
    N2 = 20
    x2 = jax.random.normal(jax.random.PRNGKey(1), (N2, C, H, W), jnp.float32)
    expected2 = np.asarray(ref(x2, params))
    out2 = jax.block_until_ready(my_ensemble_forward(x2, *fused_f32))
    assert out2.shape == (N2, NB_CLASSES)
    np.testing.assert_allclose(np.asarray(out2), expected2, rtol=2e-2, atol=2e-3)

    print("KERNEL_OK")
</pallas_src>

<mosaic_0001>
module attributes {stable_mosaic.version = 11 : i64} {
  func.func @fused_ensemble_kernel(%arg0: i32, %arg1: memref<2x4x256xf32, #tpu.memory_space<vmem>>, %arg2: memref<4x1024xf32, #tpu.memory_space<vmem>>, %arg3: memref<1x1024xf32, #tpu.memory_space<vmem>>, %arg4: memref<1024x128xf32, #tpu.memory_space<vmem>>, %arg5: memref<1x128xf32, #tpu.memory_space<vmem>>, %arg6: memref<2x128xf32, #tpu.memory_space<vmem>>) attributes {dimension_semantics = [#tpu.dimension_semantics<parallel>], iteration_bounds = array<i64: 1>, scalar_prefetch = 0 : i64, scratch_operands = 0 : i64, tpu.core_type = #tpu.core_type<tc>, window_params = [{transform_indices = @transform_0, window_bounds = array<i64: 2, 4, 256>}, {pipeline_mode = #tpu.pipeline_mode<synchronous>, transform_indices = @transform_1, window_bounds = array<i64: 4, 1024>}, {pipeline_mode = #tpu.pipeline_mode<synchronous>, transform_indices = @transform_2, window_bounds = array<i64: 1, 1024>}, {pipeline_mode = #tpu.pipeline_mode<synchronous>, transform_indices = @transform_3, window_bounds = array<i64: 1024, 128>}, {pipeline_mode = #tpu.pipeline_mode<synchronous>, transform_indices = @transform_4, window_bounds = array<i64: 1, 128>}, {transform_indices = @transform_5, window_bounds = array<i64: 2, 128>}]} {
    %c0 = arith.constant 0 : index
    %c0_0 = arith.constant 0 : index
    %c0_1 = arith.constant 0 : index
    %0 = vector.load %arg1[%c0, %c0_0, %c0_1] : memref<2x4x256xf32, #tpu.memory_space<vmem>>, vector<2x4x256xf32>
    %cst = arith.constant dense<0.000000e+00> : vector<2x4xf32>
    %1 = vector.multi_reduction <add>, %0, %cst [2] : vector<2x4x256xf32> to vector<2x4xf32>
    %cst_2 = arith.constant 3.906250e-03 : f32
    %2 = vector.broadcast %cst_2 : f32 to vector<2x4xf32>
    %3 = arith.mulf %1, %2 : vector<2x4xf32>
    %c0_3 = arith.constant 0 : index
    %c0_4 = arith.constant 0 : index
    %4 = vector.load %arg2[%c0_3, %c0_4] : memref<4x1024xf32, #tpu.memory_space<vmem>>, vector<4x1024xf32>
    %cst_5 = arith.constant dense<0.000000e+00> : vector<2x1024xf32>
    %5 = tpu.matmul %3, %4, %cst_5 {dimension_numbers = #tpu.dot_dimension_numbers<[1], [0], [0], [1], [0, 0, 1, 1], [], []>} : vector<2x4xf32>, vector<4x1024xf32>, vector<2x1024xf32> -> vector<2x1024xf32>
    %c0_6 = arith.constant 0 : index
    %c0_7 = arith.constant 0 : index
    %6 = vector.load %arg3[%c0_6, %c0_7] : memref<1x1024xf32, #tpu.memory_space<vmem>>, vector<1x1024xf32>
    %7 = vector.broadcast %6 : vector<1x1024xf32> to vector<2x1024xf32>
    %8 = arith.addf %5, %7 : vector<2x1024xf32>
    %cst_8 = arith.constant 0.000000e+00 : f32
    %9 = vector.broadcast %cst_8 : f32 to vector<2x1024xf32>
    %10 = arith.maximumf %8, %9 : vector<2x1024xf32>
    %c0_9 = arith.constant 0 : index
    %c0_10 = arith.constant 0 : index
    %11 = vector.load %arg4[%c0_9, %c0_10] : memref<1024x128xf32, #tpu.memory_space<vmem>>, vector<1024x128xf32>
    %cst_11 = arith.constant dense<0.000000e+00> : vector<2x128xf32>
    %12 = tpu.matmul %10, %11, %cst_11 {dimension_numbers = #tpu.dot_dimension_numbers<[1], [0], [0], [1], [0, 0, 1, 1], [], []>} : vector<2x1024xf32>, vector<1024x128xf32>, vector<2x128xf32> -> vector<2x128xf32>
    %c0_12 = arith.constant 0 : index
    %c0_13 = arith.constant 0 : index
    %13 = vector.load %arg5[%c0_12, %c0_13] : memref<1x128xf32, #tpu.memory_space<vmem>>, vector<1x128xf32>
    %14 = vector.broadcast %13 : vector<1x128xf32> to vector<2x128xf32>
    %15 = arith.addf %12, %14 : vector<2x128xf32>
    %c0_14 = arith.constant 0 : index
    %c0_15 = arith.constant 0 : index
    %16 = vector.load %arg6[%c0_14, %c0_15] : memref<2x128xf32, #tpu.memory_space<vmem>>, vector<2x128xf32>
    tpu.vector_store %arg6[%c0_14, %c0_15], %15 {strides = array<i32>} : memref<2x128xf32, #tpu.memory_space<vmem>>, vector<2x128xf32>,
    return
  }
  func.func @transform_0(%arg0: i32) -> (i32, i32, i32) {
    %c0_i32 = arith.constant 0 : i32
    %c0_i32_0 = arith.constant 0 : i32
    %c0_i32_1 = arith.constant 0 : i32
    return %arg0, %c0_i32, %c0_i32_0 : i32, i32, i32
  }
  func.func @transform_1(%arg0: i32) -> (i32, i32) {
    %c0_i32 = arith.constant 0 : i32
    %c0_i32_0 = arith.constant 0 : i32
    %c0_i32_1 = arith.constant 0 : i32
    return %c0_i32, %c0_i32_0 : i32, i32
  }
  func.func @transform_2(%arg0: i32) -> (i32, i32) {
    %c0_i32 = arith.constant 0 : i32
    %c0_i32_0 = arith.constant 0 : i32
    %c0_i32_1 = arith.constant 0 : i32
    return %c0_i32, %c0_i32_0 : i32, i32
  }
  func.func @transform_3(%arg0: i32) -> (i32, i32) {
    %c0_i32 = arith.constant 0 : i32
    %c0_i32_0 = arith.constant 0 : i32
    %c0_i32_1 = arith.constant 0 : i32
    return %c0_i32, %c0_i32_0 : i32, i32
  }
  func.func @transform_4(%arg0: i32) -> (i32, i32) {
    %c0_i32 = arith.constant 0 : i32
    %c0_i32_0 = arith.constant 0 : i32
    %c0_i32_1 = arith.constant 0 : i32
    return %c0_i32, %c0_i32_0 : i32, i32
  }
  func.func @transform_5(%arg0: i32) -> (i32, i32) {
    %c0_i32 = arith.constant 0 : i32
    %c0_i32_0 = arith.constant 0 : i32
    return %arg0, %c0_i32 : i32, i32
  }
}

</mosaic_0001>

<llo_original>
// kernel: my_ensemble_forward.1
$region0: #{my_ensemble_forward.1}
  #allocation0 [shape = 'u32[]', space=smem, size = 0x4, offset = 0x4, fixed_abs, tag = 'smem constant byte address 0x4 - core index']
  #allocation1 [shape = 'u32[144,128]{1,0:T(1,128)}', space=vmem, size = 0x12000, scoped, tag = 'internal scratch']
  %s0 = inlined_call_operand.vmem [shape: f32[2,4,256], index: 0, kind: input, shape index: {}]
  %s1 = inlined_call_operand.vmem [shape: f32[4,1024], index: 1, kind: input, shape index: {}]
  %s2 = inlined_call_operand.vmem [shape: f32[1,1024], index: 2, kind: input, shape index: {}]
  %s3 = inlined_call_operand.hbm [shape: f32[1024,128], index: 3, kind: input, shape index: {}]
  %s4 = inlined_call_operand.vmem [shape: f32[1,128], index: 4, kind: input, shape index: {}]
  %s5 = inlined_call_operand.hbm [shape: f32[2,128], index: 5, kind: output, shape index: {}]
  %s6 = sld [smem:[#allocation0]]
  $region34: #{my_ensemble_forward.1} parent=0
    _
  %s8 = ssub.s32 1, %s6
  %s9 = scalar_select 0, %s8, %s6
  $region1: #{my_ensemble_forward.1} parent=0
    #allocation2 [shape = 'u8[524288]{0}', space=vmem, size = 0x80000, scoped, tag = 'input window, operand 3, single buffered']
    #allocation3 [shape = 's32[1]{0}', space=sflag, size = 0x4, scoped, tag = 'scoped memory for my_ensemble_forward.1']
    #allocation4 [shape = 's32[1]{0}', space=sflag, size = 0x4, scoped, tag = 'scoped memory for my_ensemble_forward.1']
    #allocation5 [shape = 'u8[1024]{0}', space=vmem, size = 0x400, scoped, tag = 'output window, operand 0, single buffered']
    %10 = vsyncpa [#allocation3], 0
    %11 = vsyncpa [#allocation4], 0
    // Predicated region
    $region2: #{my_ensemble_forward.1} parent=1 // pred_check
      _
    $region3: #{my_ensemble_forward.1} parent=1 // pred_check_branch
      %13 = sbr.rel (0) target = $region5
    $region4: #{my_ensemble_forward.1} parent=1 // pred_region
      _
    $region5: #{my_ensemble_forward.1} parent=1 // pred_fallthru
      _
    // Predicated region
    $region6: #{my_ensemble_forward.1} parent=1 // pred_check
      _
    $region7: #{my_ensemble_forward.1} parent=1 // pred_check_branch
      %15 = sbr.rel (0) target = $region9
    $region8: #{my_ensemble_forward.1} parent=1 // pred_region
      _
    $region9: #{my_ensemble_forward.1} parent=1 // pred_fallthru
      _
    // Predicated region
    $region10: #{my_ensemble_forward.1} parent=1 // pred_check
      _
    $region11: #{my_ensemble_forward.1} parent=1 // pred_check_branch
      %17 = sbr.rel (0) target = $region13
    $region12: #{my_ensemble_forward.1} parent=1 // pred_region
      _
    $region13: #{my_ensemble_forward.1} parent=1 // pred_fallthru
      _
    // Predicated region
    $region14: #{my_ensemble_forward.1} parent=1 // pred_check
      _
    $region15: #{my_ensemble_forward.1} parent=1 // pred_check_branch
      %19 = sbr.rel (0) target = $region17
    $region16: #{my_ensemble_forward.1} parent=1 // pred_region
      %s21 = ssub.s32 16384, 16384
      %22 = vsyncadd [#allocation3], %s21
      %s23 = sshll.u32 [#allocation2], 4
      %s24 = int_to_ptr.vmem [resolvable:$true] %s23
      %29 = dma.hbm_to_vmem [thread:$0]  %s3, 16384, %s24, [#allocation3], 128, 128, 8
    $region17: #{my_ensemble_forward.1} parent=1 // pred_fallthru
      _
    // Predicated region
    $region18: #{my_ensemble_forward.1} parent=1 // pred_check
      _
    $region19: #{my_ensemble_forward.1} parent=1 // pred_check_branch
      %31 = sbr.rel (0) target = $region21
    $region20: #{my_ensemble_forward.1} parent=1 // pred_region
      _
    $region21: #{my_ensemble_forward.1} parent=1 // pred_fallthru
      _
    // Predicated region
    $region22: #{my_ensemble_forward.1} parent=1 // pred_check
      _
    $region23: #{my_ensemble_forward.1} parent=1 // pred_check_branch
      %33 = sbr.rel (0) target = $region25
    $region24: #{my_ensemble_forward.1} parent=1 // pred_region
      %34 = dma.done [#allocation3], 16384
    $region25: #{my_ensemble_forward.1} parent=1 // pred_fallthru
      _
    %v35 = vld [vmem:[%s0] sm:$0xff]
    %v36 = vld [vmem:[%s0 + $0x8] sm:$0xff]
    %v39 = vcombine.high %v35, %v35
    %v40 = vcombine.high %v36, %v36
    %vm43 = vcmask 1043456
    %v44 = vsel %vm43, %v35, 0.0
    %v45 = vsel %vm43, %v39, 0.0
    %v46 = vadd.f32 %v44, %v45
    %47 = vadd.xlane.f32.xlu0 %v46
    %v48 = vpop.xlane.xlu0 %47
    %v49 = vsel %vm43, %v36, 0.0
    %v50 = vsel %vm43, %v40, 0.0
    %v51 = vadd.f32 %v49, %v50
    %52 = vadd.xlane.f32.xlu0 %v51
    %v53 = vpop.xlane.xlu0 %52
    %v54 = vmul.f32 %v48, 0.00390625
    %v55 = vmul.f32 %v53, 0.00390625
    %v56 = vld [vmem:[%s1] sm:$0xff]
    %v57 = vld [vmem:[%s1 + $0x8] sm:$0xff]
    %v58 = vld [vmem:[%s1 + $0x10] sm:$0xff]
    %v59 = vld [vmem:[%s1 + $0x18] sm:$0xff]
    %v60 = vld [vmem:[%s2] sm:$0xff]
    %v62 = vlaneseq
    %v63 = vshrl.u32 %v62, 7
    %v64 = vsub.s32 0, %v63
    %v65 = vrot.slane %v60, %v64
    %v66 = vlaneseq
    %v67 = vshrl.u32 %v66, 7
    %v68 = vsub.s32 1, %v67
    %v69 = vrot.slane %v60, %v68
    %v70 = vlaneseq
    %v71 = vshrl.u32 %v70, 7
    %v72 = vsub.s32 2, %v71
    %v73 = vrot.slane %v60, %v72
    %v74 = vlaneseq
    %v75 = vshrl.u32 %v74, 7
    %v76 = vsub.s32 3, %v75
    %v77 = vrot.slane %v60, %v76
    %v78 = vlaneseq
    %v79 = vshrl.u32 %v78, 7
    %v80 = vsub.s32 4, %v79
    %v81 = vrot.slane %v60, %v80
    %v82 = vlaneseq
    %v83 = vshrl.u32 %v82, 7
    %v84 = vsub.s32 5, %v83
    %v85 = vrot.slane %v60, %v84
    %v86 = vlaneseq
    %v87 = vshrl.u32 %v86, 7
    %v88 = vsub.s32 6, %v87
    %v89 = vrot.slane %v60, %v88
    %v90 = vlaneseq
    %v91 = vshrl.u32 %v90, 7
    %v92 = vsub.s32 7, %v91
    %v93 = vrot.slane %v60, %v92
    %v104 = vlaneseq
    %v105 = vand.u32 %v104, 127
    %v106 = vlaneseq
    %v107 = vshrl.u32 %v106, 7
    %v108 = vsub.s32 %v105, %v107
    %v109 = vrot.slane %v54, %v108
    %v110 = vlaneseq
    %v111 = vshrl.u32 %v110, 7
    %v112 = vsub.s32 %v105, %v111
    %v113 = vrot.slane %v55, %v112
    %vm114 = vcmask 1041409
    %v115 = vsel %vm114, %v113, %v109
    %v120 = vcombine.high %v56, %v56
    %v121 = vcombine.high %v57, %v57
    %v122 = vcombine.high %v58, %v58
    %v123 = vcombine.high %v59, %v59
    %vm124 = vcmask 31744
    %v125 = vsel %vm124, %v115, 0
    %v127 = vsel %vm43, %v56, 0
    %v129 = vsel %vm43, %v120, 0
    %v131 = vsel %vm43, %v57, 0
    %v133 = vsel %vm43, %v121, 0
    %v135 = vsel %vm43, %v58, 0
    %v137 = vsel %vm43, %v122, 0
    %v139 = vsel %vm43, %v59, 0
    %v141 = vsel %vm43, %v123, 0
    %143 = vmatprep.subr.mxu0 %v129
    %144 = vmatpush1.msra.mxu0 %v127
    %145 = vmatprep.subr.mxu0 0.0
    %146 = vmatpush1.msra.mxu0 0.0
    %147 = vmatprep.subr.mxu0 0.0
    %148 = vmatpush1.msra.mxu0 0.0
    %149 = vmatprep.subr.mxu0 0.0
    %150 = vmatpush1.msra.mxu0 0.0
    %151 = vmatprep.subr.mxu0 0.0
    %152 = vmatpush1.msra.mxu0 0.0
    %153 = vmatprep.subr.mxu0 0.0
    %154 = vmatpush1.msra.mxu0 0.0
    %155 = vmatprep.subr.mxu0 0.0
    %156 = vmatpush1.msra.mxu0 0.0
    %157 = vmatprep.subr.mxu0 0.0
    %158 = vmatpush1.msra.mxu0 0.0
    %159 = vmatprep.subr.mxu0 0.0
    %160 = vmatpush1.msra.mxu0 0.0
    %161 = vmatprep.subr.mxu0 0.0
    %162 = vmatpush1.msra.mxu0 0.0
    %163 = vmatprep.subr.mxu0 0.0
    %164 = vmatpush1.msra.mxu0 0.0
    %165 = vmatprep.subr.mxu0 0.0
    %166 = vmatpush1.msra.mxu0 0.0
    %167 = vmatprep.subr.mxu0 0.0
    %168 = vmatpush1.msra.mxu0 0.0
    %169 = vmatprep.subr.mxu0 0.0
    %170 = vmatpush1.msra.mxu0 0.0
    %171 = vmatprep.subr.mxu0 0.0
    %172 = vmatpush1.msra.mxu0 0.0
    %173 = vmatprep.subr.mxu0 0.0
    %174 = vmatpush1.msra.mxu0 0.0
    %175 = vmatprep.subr.mxu0 0.0
    %176 = vmatpush1.msra.mxu0 0.0
    %177 = vmatprep.subr.mxu0 0.0
    %178 = vmatpush1.msra.mxu0 0.0
    %179 = vmatprep.subr.mxu0 0.0
    %180 = vmatpush1.msra.mxu0 0.0
    %181 = vmatprep.subr.mxu0 0.0
    %182 = vmatpush1.msra.mxu0 0.0
    %183 = vmatprep.subr.mxu0 0.0
    %184 = vmatpush1.msra.mxu0 0.0
    %185 = vmatprep.subr.mxu0 0.0
    %186 = vmatpush1.msra.mxu0 0.0
    %187 = vmatprep.subr.mxu0 0.0
    %188 = vmatpush1.msra.mxu0 0.0
    %189 = vmatprep.subr.mxu0 0.0
    %190 = vmatpush1.msra.mxu0 0.0
    %191 = vmatprep.subr.mxu0 0.0
    %192 = vmatpush1.msra.mxu0 0.0
    %193 = vmatprep.subr.mxu0 0.0
    %194 = vmatpush1.msra.mxu0 0.0
    %195 = vmatprep.subr.mxu0 0.0
    %196 = vmatpush1.msra.mxu0 0.0
    %197 = vmatprep.subr.mxu0 0.0
    %198 = vmatpush1.msra.mxu0 0.0
    %199 = vmatprep.subr.mxu0 0.0
    %200 = vmatpush1.msra.mxu0 0.0
    %201 = vmatprep.subr.mxu0 0.0
    %202 = vmatpush1.msra.mxu0 0.0
    %203 = vmatprep.subr.mxu0 0.0
    %204 = vmatpush1.msra.mxu0 0.0
    %205 = vmatprep.subr.mxu0 0.0
    %206 = vmatpush1.msra.mxu0 0.0
    %207 = vmatprep.mubr.f32.mxu0 0.0
    %208 = vmatmul.mubr.f32.gmra.mrb[0].mxu0 %v125
    %v209 = vpop.f32.mrb[0].mxu0
    %v210 = vadd.f32 %v65, %v209
    %v211 = vpop.f32.mrb[0].mxu0
    %v212 = vadd.f32 %v69, %v211
    %213 = vdwg.mxu0
    %214 = vmatprep.subr.mxu0 %v133
    %215 = vmatpush1.msra.mxu0 %v131
    %216 = vmatprep.subr.mxu0 0.0
    %217 = vmatpush1.msra.mxu0 0.0
    %218 = vmatprep.subr.mxu0 0.0
    %219 = vmatpush1.msra.mxu0 0.0
    %220 = vmatprep.subr.mxu0 0.0
    %221 = vmatpush1.msra.mxu0 0.0
    %222 = vmatprep.subr.mxu0 0.0
    %223 = vmatpush1.msra.mxu0 0.0
    %224 = vmatprep.subr.mxu0 0.0
    %225 = vmatpush1.msra.mxu0 0.0
    %226 = vmatprep.subr.mxu0 0.0
    %227 = vmatpush1.msra.mxu0 0.0
    %228 = vmatprep.subr.mxu0 0.0
    %229 = vmatpush1.msra.mxu0 0.0
    %230 = vmatprep.subr.mxu0 0.0
    %231 = vmatpush1.msra.mxu0 0.0
    %232 = vmatprep.subr.mxu0 0.0
    %233 = vmatpush1.msra.mxu0 0.0
    %234 = vmatprep.subr.mxu0 0.0
    %235 = vmatpush1.msra.mxu0 0.0
    %236 = vmatprep.subr.mxu0 0.0
    %237 = vmatpush1.msra.mxu0 0.0
    %238 = vmatprep.subr.mxu0 0.0
    %239 = vmatpush1.msra.mxu0 0.0
    %240 = vmatprep.subr.mxu0 0.0
    %241 = vmatpush1.msra.mxu0 0.0
    %242 = vmatprep.subr.mxu0 0.0
    %243 = vmatpush1.msra.mxu0 0.0
    %244 = vmatprep.subr.mxu0 0.0
    %245 = vmatpush1.msra.mxu0 0.0
    %246 = vmatprep.subr.mxu0 0.0
    %247 = vmatpush1.msra.mxu0 0.0
    %248 = vmatprep.subr.mxu0 0.0
    %249 = vmatpush1.msra.mxu0 0.0
    %250 = vmatprep.subr.mxu0 0.0
    %251 = vmatpush1.msra.mxu0 0.0
    %252 = vmatprep.subr.mxu0 0.0
    %253 = vmatpush1.msra.mxu0 0.0
    %254 = vmatprep.subr.mxu0 0.0
    %255 = vmatpush1.msra.mxu0 0.0
    %256 = vmatprep.subr.mxu0 0.0
    %257 = vmatpush1.msra.mxu0 0.0
    %258 = vmatprep.subr.mxu0 0.0
    %259 = vmatpush1.msra.mxu0 0.0
    %260 = vmatprep.subr.mxu0 0.0
    %261 = vmatpush1.msra.mxu0 0.0
    %262 = vmatprep.subr.mxu0 0.0
    %263 = vmatpush1.msra.mxu0 0.0
    %264 = vmatprep.subr.mxu0 0.0
    %265 = vmatpush1.msra.mxu0 0.0
    %266 = vmatprep.subr.mxu0 0.0
    %267 = vmatpush1.msra.mxu0 0.0
    %268 = vmatprep.subr.mxu0 0.0
    %269 = vmatpush1.msra.mxu0 0.0
    %270 = vmatprep.subr.mxu0 0.0
    %271 = vmatpush1.msra.mxu0 0.0
    %272 = vmatprep.subr.mxu0 0.0
    %273 = vmatpush1.msra.mxu0 0.0
    %274 = vmatprep.subr.mxu0 0.0
    %275 = vmatpush1.msra.mxu0 0.0
    %276 = vmatprep.subr.mxu0 0.0
    %277 = vmatpush1.msra.mxu0 0.0
    %278 = vmatprep.mubr.f32.mxu0 0.0
    %279 = vmatmul.mubr.f32.gmra.mrb[0].mxu0 %v125
    %v280 = vpop.f32.mrb[0].mxu0
    %v281 = vadd.f32 %v73, %v280
    %v282 = vpop.f32.mrb[0].mxu0
    %v283 = vadd.f32 %v77, %v282
    %284 = vdwg.mxu0
    %285 = vmatprep.subr.mxu0 %v137
    %286 = vmatpush1.msra.mxu0 %v135
    %287 = vmatprep.subr.mxu0 0.0
    %288 = vmatpush1.msra.mxu0 0.0
    %289 = vmatprep.subr.mxu0 0.0
    %290 = vmatpush1.msra.mxu0 0.0
    %291 = vmatprep.subr.mxu0 0.0
    %292 = vmatpush1.msra.mxu0 0.0
    %293 = vmatprep.subr.mxu0 0.0
    %294 = vmatpush1.msra.mxu0 0.0
    %295 = vmatprep.subr.mxu0 0.0
    %296 = vmatpush1.msra.mxu0 0.0
    %297 = vmatprep.subr.mxu0 0.0
    %298 = vmatpush1.msra.mxu0 0.0
    %299 = vmatprep.subr.mxu0 0.0
    %300 = vmatpush1.msra.mxu0 0.0
    %301 = vmatprep.subr.mxu0 0.0
    %302 = vmatpush1.msra.mxu0 0.0
    %303 = vmatprep.subr.mxu0 0.0
    %304 = vmatpush1.msra.mxu0 0.0
    %305 = vmatprep.subr.mxu0 0.0
    %306 = vmatpush1.msra.mxu0 0.0
    %307 = vmatprep.subr.mxu0 0.0
    %308 = vmatpush1.msra.mxu0 0.0
    %309 = vmatprep.subr.mxu0 0.0
    %310 = vmatpush1.msra.mxu0 0.0
    %311 = vmatprep.subr.mxu0 0.0
    %312 = vmatpush1.msra.mxu0 0.0
    %313 = vmatprep.subr.mxu0 0.0
    %314 = vmatpush1.msra.mxu0 0.0
    %315 = vmatprep.subr.mxu0 0.0
    %316 = vmatpush1.msra.mxu0 0.0
    %317 = vmatprep.subr.mxu0 0.0
    %318 = vmatpush1.msra.mxu0 0.0
    %319 = vmatprep.subr.mxu0 0.0
    %320 = vmatpush1.msra.mxu0 0.0
    %321 = vmatprep.subr.mxu0 0.0
    %322 = vmatpush1.msra.mxu0 0.0
    %323 = vmatprep.subr.mxu0 0.0
    %324 = vmatpush1.msra.mxu0 0.0
    %325 = vmatprep.subr.mxu0 0.0
    %326 = vmatpush1.msra.mxu0 0.0
    %327 = vmatprep.subr.mxu0 0.0
    %328 = vmatpush1.msra.mxu0 0.0
    %329 = vmatprep.subr.mxu0 0.0
    %330 = vmatpush1.msra.mxu0 0.0
    %331 = vmatprep.subr.mxu0 0.0
    %332 = vmatpush1.msra.mxu0 0.0
    %333 = vmatprep.subr.mxu0 0.0
    %334 = vmatpush1.msra.mxu0 0.0
    %335 = vmatprep.subr.mxu0 0.0
    %336 = vmatpush1.msra.mxu0 0.0
    %337 = vmatprep.subr.mxu0 0.0
    %338 = vmatpush1.msra.mxu0 0.0
    %339 = vmatprep.subr.mxu0 0.0
    %340 = vmatpush1.msra.mxu0 0.0
    %341 = vmatprep.subr.mxu0 0.0
    %342 = vmatpush1.msra.mxu0 0.0
    %343 = vmatprep.subr.mxu0 0.0
    %344 = vmatpush1.msra.mxu0 0.0
    %345 = vmatprep.subr.mxu0 0.0
    %346 = vmatpush1.msra.mxu0 0.0
    %347 = vmatprep.subr.mxu0 0.0
    %348 = vmatpush1.msra.mxu0 0.0
    %349 = vmatprep.mubr.f32.mxu0 0.0
    %350 = vmatmul.mubr.f32.gmra.mrb[0].mxu0 %v125
    %v351 = vpop.f32.mrb[0].mxu0
    %v352 = vadd.f32 %v81, %v351
    %v353 = vpop.f32.mrb[0].mxu0
    %v354 = vadd.f32 %v85, %v353
    %355 = vdwg.mxu0
    %356 = vmatprep.subr.mxu0 %v141
    %357 = vmatpush1.msra.mxu0 %v139
    %358 = vmatprep.subr.mxu0 0.0
    %359 = vmatpush1.msra.mxu0 0.0
    %360 = vmatprep.subr.mxu0 0.0
    %361 = vmatpush1.msra.mxu0 0.0
    %362 = vmatprep.subr.mxu0 0.0
    %363 = vmatpush1.msra.mxu0 0.0
    %364 = vmatprep.subr.mxu0 0.0
    %365 = vmatpush1.msra.mxu0 0.0
    %366 = vmatprep.subr.mxu0 0.0
    %367 = vmatpush1.msra.mxu0 0.0
    %368 = vmatprep.subr.mxu0 0.0
    %369 = vmatpush1.msra.mxu0 0.0
    %370 = vmatprep.subr.mxu0 0.0
    %371 = vmatpush1.msra.mxu0 0.0
    %372 = vmatprep.subr.mxu0 0.0
    %373 = vmatpush1.msra.mxu0 0.0
    %374 = vmatprep.subr.mxu0 0.0
    %375 = vmatpush1.msra.mxu0 0.0
    %376 = vmatprep.subr.mxu0 0.0
    %377 = vmatpush1.msra.mxu0 0.0
    %378 = vmatprep.subr.mxu0 0.0
    %379 = vmatpush1.msra.mxu0 0.0
    %380 = vmatprep.subr.mxu0 0.0
    %381 = vmatpush1.msra.mxu0 0.0
    %382 = vmatprep.subr.mxu0 0.0
    %383 = vmatpush1.msra.mxu0 0.0
    %384 = vmatprep.subr.mxu0 0.0
    %385 = vmatpush1.msra.mxu0 0.0
    %386 = vmatprep.subr.mxu0 0.0
    %387 = vmatpush1.msra.mxu0 0.0
    %388 = vmatprep.subr.mxu0 0.0
    %389 = vmatpush1.msra.mxu0 0.0
    %390 = vmatprep.subr.mxu0 0.0
    %391 = vmatpush1.msra.mxu0 0.0
    %392 = vmatprep.subr.mxu0 0.0
    %393 = vmatpush1.msra.mxu0 0.0
    %394 = vmatprep.subr.mxu0 0.0
    %395 = vmatpush1.msra.mxu0 0.0
    %396 = vmatprep.subr.mxu0 0.0
    %397 = vmatpush1.msra.mxu0 0.0
    %398 = vmatprep.subr.mxu0 0.0
    %399 = vmatpush1.msra.mxu0 0.0
    %400 = vmatprep.subr.mxu0 0.0
    %401 = vmatpush1.msra.mxu0 0.0
    %402 = vmatprep.subr.mxu0 0.0
    %403 = vmatpush1.msra.mxu0 0.0
    %404 = vmatprep.subr.mxu0 0.0
    %405 = vmatpush1.msra.mxu0 0.0
    %406 = vmatprep.subr.mxu0 0.0
    %407 = vmatpush1.msra.mxu0 0.0
    %408 = vmatprep.subr.mxu0 0.0
    %409 = vmatpush1.msra.mxu0 0.0
    %410 = vmatprep.subr.mxu0 0.0
    %411 = vmatpush1.msra.mxu0 0.0
    %412 = vmatprep.subr.mxu0 0.0
    %413 = vmatpush1.msra.mxu0 0.0
    %414 = vmatprep.subr.mxu0 0.0
    %415 = vmatpush1.msra.mxu0 0.0
    %416 = vmatprep.subr.mxu0 0.0
    %417 = vmatpush1.msra.mxu0 0.0
    %418 = vmatprep.subr.mxu0 0.0
    %419 = vmatpush1.msra.mxu0 0.0
    %420 = vmatprep.mubr.f32.mxu0 0.0
    %421 = vmatmul.mubr.f32.gmra.mrb[0].mxu0 %v125
    %v422 = vpop.f32.mrb[0].mxu0
    %v423 = vadd.f32 %v89, %v422
    %v424 = vpop.f32.mrb[0].mxu0
    %v425 = vadd.f32 %v93, %v424
    %426 = vdwg.mxu0
    %v427 = vmax.f32 %v210, 0.0
    %v428 = vmax.f32 %v212, 0.0
    %v429 = vmax.f32 %v281, 0.0
    %v430 = vmax.f32 %v283, 0.0
    %v431 = vmax.f32 %v352, 0.0
    %v432 = vmax.f32 %v354, 0.0
    %v433 = vmax.f32 %v423, 0.0
    %v434 = vmax.f32 %v425, 0.0
    %v435 = vld [vmem:[#allocation2] sm:$0xff]
    %v436 = vld [vmem:[#allocation2 + $0x8] sm:$0xff]
    %v437 = vld [vmem:[#allocation2 + $0x10] sm:$0xff]
    %v438 = vld [vmem:[#allocation2 + $0x18] sm:$0xff]
    %v439 = vld [vmem:[#allocation2 + $0x20] sm:$0xff]
    %v440 = vld [vmem:[#allocation2 + $0x28] sm:$0xff]
    %v441 = vld [vmem:[#allocation2 + $0x30] sm:$0xff]
    %v442 = vld [vmem:[#allocation2 + $0x38] sm:$0xff]
    %v443 = vld [vmem:[#allocation2 + $0x40] sm:$0xff]
    %v444 = vld [vmem:[#allocation2 + $0x48] sm:$0xff]
    %v445 = vld [vmem:[#allocation2 + $0x50] sm:$0xff]
    %v446 = vld [vmem:[#allocation2 + $0x58] sm:$0xff]
    %v447 = vld [vmem:[#allocation2 + $0x60] sm:$0xff]
    %v448 = vld [vmem:[#allocation2 + $0x68] sm:$0xff]
    %v449 = vld [vmem:[#allocation2 + $0x70] sm:$0xff]
    %v450 = vld [vmem:[#allocation2 + $0x78] sm:$0xff]
    %v451 = vld [vmem:[#allocation2 + $0x80] sm:$0xff]
    %v452 = vld [vmem:[#allocation2 + $0x88] sm:$0xff]
    %v453 = vld [vmem:[#allocation2 + $0x90] sm:$0xff]
    %v454 = vld [vmem:[#allocation2 + $0x98] sm:$0xff]
    %v455 = vld [vmem:[#allocation2 + $0xa0] sm:$0xff]
    %v456 = vld [vmem:[#allocation2 + $0xa8] sm:$0xff]
    %v457 = vld [vmem:[#allocation2 + $0xb0] sm:$0xff]
    %v458 = vld [vmem:[#allocation2 + $0xb8] sm:$0xff]
    %v459 = vld [vmem:[#allocation2 + $0xc0] sm:$0xff]
    %v460 = vld [vmem:[#allocation2 + $0xc8] sm:$0xff]
    %v461 = vld [vmem:[#allocation2 + $0xd0] sm:$0xff]
    %v462 = vld [vmem:[#allocation2 + $0xd8] sm:$0xff]
    %v463 = vld [vmem:[#allocation2 + $0xe0] sm:$0xff]
    %v464 = vld [vmem:[#allocation2 + $0xe8] sm:$0xff]
    %v465 = vld [vmem:[#allocation2 + $0xf0] sm:$0xff]
    %v466 = vld [vmem:[#allocation2 + $0xf8] sm:$0xff]
    %v467 = vld [vmem:[#allocation2 + $0x100] sm:$0xff]
    %v468 = vld [vmem:[#allocation2 + $0x108] sm:$0xff]
    %v469 = vld [vmem:[#allocation2 + $0x110] sm:$0xff]
    %v470 = vld [vmem:[#allocation2 + $0x118] sm:$0xff]
    %v471 = vld [vmem:[#allocation2 + $0x120] sm:$0xff]
    %v472 = vld [vmem:[#allocation2 + $0x128] sm:$0xff]
    %v473 = vld [vmem:[#allocation2 + $0x130] sm:$0xff]
    %v474 = vld [vmem:[#allocation2 + $0x138] sm:$0xff]
    %v475 = vld [vmem:[#allocation2 + $0x140] sm:$0xff]
    %v476 = vld [vmem:[#allocation2 + $0x148] sm:$0xff]
    %v477 = vld [vmem:[#allocation2 + $0x150] sm:$0xff]
    %v478 = vld [vmem:[#allocation2 + $0x158] sm:$0xff]
    %v479 = vld [vmem:[#allocation2 + $0x160] sm:$0xff]
    %v480 = vld [vmem:[#allocation2 + $0x168] sm:$0xff]
    %v481 = vld [vmem:[#allocation2 + $0x170] sm:$0xff]
    %v482 = vld [vmem:[#allocation2 + $0x178] sm:$0xff]
    %v483 = vld [vmem:[#allocation2 + $0x180] sm:$0xff]
    %v484 = vld [vmem:[#allocation2 + $0x188] sm:$0xff]
    %v485 = vld [vmem:[#allocation2 + $0x190] sm:$0xff]
    %v486 = vld [vmem:[#allocation2 + $0x198] sm:$0xff]
    %v487 = vld [vmem:[#allocation2 + $0x1a0] sm:$0xff]
    %v488 = vld [vmem:[#allocation2 + $0x1a8] sm:$0xff]
    %v489 = vld [vmem:[#allocation2 + $0x1b0] sm:$0xff]
    %v490 = vld [vmem:[#allocation2 + $0x1b8] sm:$0xff]
    %v491 = vld [vmem:[#allocation2 + $0x1c0] sm:$0xff]
    %v492 = vld [vmem:[#allocation2 + $0x1c8] sm:$0xff]
    %v493 = vld [vmem:[#allocation2 + $0x1d0] sm:$0xff]
    %v494 = vld [vmem:[#allocation2 + $0x1d8] sm:$0xff]
    %v495 = vld [vmem:[#allocation2 + $0x1e0] sm:$0xff]
    %v496 = vld [vmem:[#allocation2 + $0x1e8] sm:$0xff]
    %v497 = vld [vmem:[#allocation2 + $0x1f0] sm:$0xff]
    %v498 = vld [vmem:[#allocation2 + $0x1f8] sm:$0xff]
    %v499 = vld [vmem:[#allocation2 + $0x200] sm:$0xff]
    %v500 = vld [vmem:[#allocation2 + $0x208] sm:$0xff]
    %v501 = vld [vmem:[#allocation2 + $0x210] sm:$0xff]
    %v502 = vld [vmem:[#allocation2 + $0x218] sm:$0xff]
    %v503 = vld [vmem:[#allocation2 + $0x220] sm:$0xff]
    %v504 = vld [vmem:[#allocation2 + $0x228] sm:$0xff]
    %v505 = vld [vmem:[#allocation2 + $0x230] sm:$0xff]
    %v506 = vld [vmem:[#allocation2 + $0x238] sm:$0xff]
    %v507 = vld [vmem:[#allocation2 + $0x240] sm:$0xff]
    %v508 = vld [vmem:[#allocation2 + $0x248] sm:$0xff]
    %v509 = vld [vmem:[#allocation2 + $0x250] sm:$0xff]
    %v510 = vld [vmem:[#allocation2 + $0x258] sm:$0xff]
    %v511 = vld [vmem:[#allocation2 + $0x260] sm:$0xff]
    %v512 = vld [vmem:[#allocation2 + $0x268] sm:$0xff]
    %v513 = vld [vmem:[#allocation2 + $0x270] sm:$0xff]
    %v514 = vld [vmem:[#allocation2 + $0x278] sm:$0xff]
    %v515 = vld [vmem:[#allocation2 + $0x280] sm:$0xff]
    %v516 = vld [vmem:[#allocation2 + $0x288] sm:$0xff]
    %v517 = vld [vmem:[#allocation2 + $0x290] sm:$0xff]
    %v518 = vld [vmem:[#allocation2 + $0x298] sm:$0xff]
    %v519 = vld [vmem:[#allocation2 + $0x2a0] sm:$0xff]
    %v520 = vld [vmem:[#allocation2 + $0x2a8] sm:$0xff]
    %v521 = vld [vmem:[#allocation2 + $0x2b0] sm:$0xff]
    %v522 = vld [vmem:[#allocation2 + $0x2b8] sm:$0xff]
    %v523 = vld [vmem:[#allocation2 + $0x2c0] sm:$0xff]
    %v524 = vld [vmem:[#allocation2 + $0x2c8] sm:$0xff]
    %v525 = vld [vmem:[#allocation2 + $0x2d0] sm:$0xff]
    %v526 = vld [vmem:[#allocation2 + $0x2d8] sm:$0xff]
    %v527 = vld [vmem:[#allocation2 + $0x2e0] sm:$0xff]
    %v528 = vld [vmem:[#allocation2 + $0x2e8] sm:$0xff]
    %v529 = vld [vmem:[#allocation2 + $0x2f0] sm:$0xff]
    %v530 = vld [vmem:[#allocation2 + $0x2f8] sm:$0xff]
    %v531 = vld [vmem:[#allocation2 + $0x300] sm:$0xff]
    %v532 = vld [vmem:[#allocation2 + $0x308] sm:$0xff]
    %v533 = vld [vmem:[#allocation2 + $0x310] sm:$0xff]
    %v534 = vld [vmem:[#allocation2 + $0x318] sm:$0xff]
    %v535 = vld [vmem:[#allocation2 + $0x320] sm:$0xff]
    %v536 = vld [vmem:[#allocation2 + $0x328] sm:$0xff]
    %v537 = vld [vmem:[#allocation2 + $0x330] sm:$0xff]
    %v538 = vld [vmem:[#allocation2 + $0x338] sm:$0xff]
    %v539 = vld [vmem:[#allocation2 + $0x340] sm:$0xff]
    %v540 = vld [vmem:[#allocation2 + $0x348] sm:$0xff]
    %v541 = vld [vmem:[#allocation2 + $0x350] sm:$0xff]
    %v542 = vld [vmem:[#allocation2 + $0x358] sm:$0xff]
    %v543 = vld [vmem:[#allocation2 + $0x360] sm:$0xff]
    %v544 = vld [vmem:[#allocation2 + $0x368] sm:$0xff]
    %v545 = vld [vmem:[#allocation2 + $0x370] sm:$0xff]
    %v546 = vld [vmem:[#allocation2 + $0x378] sm:$0xff]
    %v547 = vld [vmem:[#allocation2 + $0x380] sm:$0xff]
    %v548 = vld [vmem:[#allocation2 + $0x388] sm:$0xff]
    %v549 = vld [vmem:[#allocation2 + $0x390] sm:$0xff]
    %v550 = vld [vmem:[#allocation2 + $0x398] sm:$0xff]
    %v551 = vld [vmem:[#allocation2 + $0x3a0] sm:$0xff]
    %v552 = vld [vmem:[#allocation2 + $0x3a8] sm:$0xff]
    %v553 = vld [vmem:[#allocation2 + $0x3b0] sm:$0xff]
    %v554 = vld [vmem:[#allocation2 + $0x3b8] sm:$0xff]
    %v555 = vld [vmem:[#allocation2 + $0x3c0] sm:$0xff]
    %v556 = vld [vmem:[#allocation2 + $0x3c8] sm:$0xff]
    %v557 = vld [vmem:[#allocation2 + $0x3d0] sm:$0xff]
    %v558 = vld [vmem:[#allocation2 + $0x3d8] sm:$0xff]
    %v559 = vld [vmem:[#allocation2 + $0x3e0] sm:$0xff]
    %v560 = vld [vmem:[#allocation2 + $0x3e8] sm:$0xff]
    %v561 = vld [vmem:[#allocation2 + $0x3f0] sm:$0xff]
    %v562 = vld [vmem:[#allocation2 + $0x3f8] sm:$0xff]
    %v563 = vld [vmem:[%s4] sm:$0x1]
    %v565 = vlaneseq
    %v566 = vshrl.u32 %v565, 7
    %v567 = vsub.s32 0, %v566
    %v568 = vrot.slane %v563, %v567
    %570 = vmatprep.subr.mxu0 0.0
    %571 = vmatpush1.msra.mxu0 %v435
    %572 = vmatprep.subr.mxu0 0.0
    %573 = vmatpush1.msra.mxu0 %v436
    %574 = vmatprep.subr.mxu0 0.0
    %575 = vmatpush1.msra.mxu0 %v437
    %576 = vmatprep.subr.mxu0 0.0
    %577 = vmatpush1.msra.mxu0 %v438
    %578 = vmatprep.subr.mxu0 0.0
    %579 = vmatpush1.msra.mxu0 %v439
    %580 = vmatprep.subr.mxu0 0.0
    %581 = vmatpush1.msra.mxu0 %v440
    %582 = vmatprep.subr.mxu0 0.0
    %583 = vmatpush1.msra.mxu0 %v441
    %584 = vmatprep.subr.mxu0 0.0
    %585 = vmatpush1.msra.mxu0 %v442
    %586 = vmatprep.subr.mxu0 0.0
    %587 = vmatpush1.msra.mxu0 %v443
    %588 = vmatprep.subr.mxu0 0.0
    %589 = vmatpush1.msra.mxu0 %v444
    %590 = vmatprep.subr.mxu0 0.0
    %591 = vmatpush1.msra.mxu0 %v445
    %592 = vmatprep.subr.mxu0 0.0
    %593 = vmatpush1.msra.mxu0 %v446
    %594 = vmatprep.subr.mxu0 0.0
    %595 = vmatpush1.msra.mxu0 %v447
    %596 = vmatprep.subr.mxu0 0.0
    %597 = vmatpush1.msra.mxu0 %v448
    %598 = vmatprep.subr.mxu0 0.0
    %599 = vmatpush1.msra.mxu0 %v449
    %600 = vmatprep.subr.mxu0 0.0
    %601 = vmatpush1.msra.mxu0 %v450
    %602 = vmatprep.subr.mxu0 0.0
    %603 = vmatpush1.msra.mxu0 %v451
    %604 = vmatprep.subr.mxu0 0.0
    %605 = vmatpush1.msra.mxu0 %v452
    %606 = vmatprep.subr.mxu0 0.0
    %607 = vmatpush1.msra.mxu0 %v453
    %608 = vmatprep.subr.mxu0 0.0
    %609 = vmatpush1.msra.mxu0 %v454
    %610 = vmatprep.subr.mxu0 0.0
    %611 = vmatpush1.msra.mxu0 %v455
    %612 = vmatprep.subr.mxu0 0.0
    %613 = vmatpush1.msra.mxu0 %v456
    %614 = vmatprep.subr.mxu0 0.0
    %615 = vmatpush1.msra.mxu0 %v457
    %616 = vmatprep.subr.mxu0 0.0
    %617 = vmatpush1.msra.mxu0 %v458
    %618 = vmatprep.subr.mxu0 0.0
    %619 = vmatpush1.msra.mxu0 %v459
    %620 = vmatprep.subr.mxu0 0.0
    %621 = vmatpush1.msra.mxu0 %v460
    %622 = vmatprep.subr.mxu0 0.0
    %623 = vmatpush1.msra.mxu0 %v461
    %624 = vmatprep.subr.mxu0 0.0
    %625 = vmatpush1.msra.mxu0 %v462
    %626 = vmatprep.subr.mxu0 0.0
    %627 = vmatpush1.msra.mxu0 %v463
    %628 = vmatprep.subr.mxu0 0.0
    %629 = vmatpush1.msra.mxu0 %v464
    %630 = vmatprep.subr.mxu0 0.0
    %631 = vmatpush1.msra.mxu0 %v465
    %632 = vmatprep.subr.mxu0 0.0
    %633 = vmatpush1.msra.mxu0 %v466
    %634 = vmatprep.mubr.f32.mxu0 %v428
    %635 = vmatmul.mubr.f32.gmra.mrb[0].mxu0 %v427
    %v636 = vpop.f32.mrb[0].mxu0
    %v637 = vadd.f32 %v568, %v636
    %v638 = vpop.f32.mrb[0].mxu0
    %639 = vdwg.mxu0
    %640 = vmatprep.subr.mxu0 0.0
    %641 = vmatpush1.msra.mxu0 %v467
    %642 = vmatprep.subr.mxu0 0.0
    %643 = vmatpush1.msra.mxu0 %v468
    %644 = vmatprep.subr.mxu0 0.0
    %645 = vmatpush1.msra.mxu0 %v469
    %646 = vmatprep.subr.mxu0 0.0
    %647 = vmatpush1.msra.mxu0 %v470
    %648 = vmatprep.subr.mxu0 0.0
    %649 = vmatpush1.msra.mxu0 %v471
    %650 = vmatprep.subr.mxu0 0.0
    %651 = vmatpush1.msra.mxu0 %v472
    %652 = vmatprep.subr.mxu0 0.0
    %653 = vmatpush1.msra.mxu0 %v473
    %654 = vmatprep.subr.mxu0 0.0
    %655 = vmatpush1.msra.mxu0 %v474
    %656 = vmatprep.subr.mxu0 0.0
    %657 = vmatpush1.msra.mxu0 %v475
    %658 = vmatprep.subr.mxu0 0.0
    %659 = vmatpush1.msra.mxu0 %v476
    %660 = vmatprep.subr.mxu0 0.0
    %661 = vmatpush1.msra.mxu0 %v477
    %662 = vmatprep.subr.mxu0 0.0
    %663 = vmatpush1.msra.mxu0 %v478
    %664 = vmatprep.subr.mxu0 0.0
    %665 = vmatpush1.msra.mxu0 %v479
    %666 = vmatprep.subr.mxu0 0.0
    %667 = vmatpush1.msra.mxu0 %v480
    %668 = vmatprep.subr.mxu0 0.0
    %669 = vmatpush1.msra.mxu0 %v481
    %670 = vmatprep.subr.mxu0 0.0
    %671 = vmatpush1.msra.mxu0 %v482
    %672 = vmatprep.subr.mxu0 0.0
    %673 = vmatpush1.msra.mxu0 %v483
    %674 = vmatprep.subr.mxu0 0.0
    %675 = vmatpush1.msra.mxu0 %v484
    %676 = vmatprep.subr.mxu0 0.0
    %677 = vmatpush1.msra.mxu0 %v485
    %678 = vmatprep.subr.mxu0 0.0
    %679 = vmatpush1.msra.mxu0 %v486
    %680 = vmatprep.subr.mxu0 0.0
    %681 = vmatpush1.msra.mxu0 %v487
    %682 = vmatprep.subr.mxu0 0.0
    %683 = vmatpush1.msra.mxu0 %v488
    %684 = vmatprep.subr.mxu0 0.0
    %685 = vmatpush1.msra.mxu0 %v489
    %686 = vmatprep.subr.mxu0 0.0
    %687 = vmatpush1.msra.mxu0 %v490
    %688 = vmatprep.subr.mxu0 0.0
    %689 = vmatpush1.msra.mxu0 %v491
    %690 = vmatprep.subr.mxu0 0.0
    %691 = vmatpush1.msra.mxu0 %v492
    %692 = vmatprep.subr.mxu0 0.0
    %693 = vmatpush1.msra.mxu0 %v493
    %694 = vmatprep.subr.mxu0 0.0
    %695 = vmatpush1.msra.mxu0 %v494
    %696 = vmatprep.subr.mxu0 0.0
    %697 = vmatpush1.msra.mxu0 %v495
    %698 = vmatprep.subr.mxu0 0.0
    %699 = vmatpush1.msra.mxu0 %v496
    %700 = vmatprep.subr.mxu0 0.0
    %701 = vmatpush1.msra.mxu0 %v497
    %702 = vmatprep.subr.mxu0 0.0
    %703 = vmatpush1.msra.mxu0 %v498
    %704 = vmatprep.mubr.f32.mxu0 %v430
    %705 = vmatmul.mubr.f32.gmra.mrb[0].mxu0 %v429
    %v706 = vpop.f32.mrb[0].mxu0
    %v707 = vadd.f32 %v637, %v706
    %v708 = vpop.f32.mrb[0].mxu0
    %709 = vdwg.mxu0
    %710 = vmatprep.subr.mxu0 0.0
    %711 = vmatpush1.msra.mxu0 %v499
    %712 = vmatprep.subr.mxu0 0.0
    %713 = vmatpush1.msra.mxu0 %v500
    %714 = vmatprep.subr.mxu0 0.0
    %715 = vmatpush1.msra.mxu0 %v501
    %716 = vmatprep.subr.mxu0 0.0
    %717 = vmatpush1.msra.mxu0 %v502
    %718 = vmatprep.subr.mxu0 0.0
    %719 = vmatpush1.msra.mxu0 %v503
    %720 = vmatprep.subr.mxu0 0.0
    %721 = vmatpush1.msra.mxu0 %v504
    %722 = vmatprep.subr.mxu0 0.0
    %723 = vmatpush1.msra.mxu0 %v505
    %724 = vmatprep.subr.mxu0 0.0
    %725 = vmatpush1.msra.mxu0 %v506
    %726 = vmatprep.subr.mxu0 0.0
    %727 = vmatpush1.msra.mxu0 %v507
    %728 = vmatprep.subr.mxu0 0.0
    %729 = vmatpush1.msra.mxu0 %v508
    %730 = vmatprep.subr.mxu0 0.0
    %731 = vmatpush1.msra.mxu0 %v509
    %732 = vmatprep.subr.mxu0 0.0
    %733 = vmatpush1.msra.mxu0 %v510
    %734 = vmatprep.subr.mxu0 0.0
    %735 = vmatpush1.msra.mxu0 %v511
    %736 = vmatprep.subr.mxu0 0.0
    %737 = vmatpush1.msra.mxu0 %v512
    %738 = vmatprep.subr.mxu0 0.0
    %739 = vmatpush1.msra.mxu0 %v513
    %740 = vmatprep.subr.mxu0 0.0
    %741 = vmatpush1.msra.mxu0 %v514
    %742 = vmatprep.subr.mxu0 0.0
    %743 = vmatpush1.msra.mxu0 %v515
    %744 = vmatprep.subr.mxu0 0.0
    %745 = vmatpush1.msra.mxu0 %v516
    %746 = vmatprep.subr.mxu0 0.0
    %747 = vmatpush1.msra.mxu0 %v517
    %748 = vmatprep.subr.mxu0 0.0
    %749 = vmatpush1.msra.mxu0 %v518
    %750 = vmatprep.subr.mxu0 0.0
    %751 = vmatpush1.msra.mxu0 %v519
    %752 = vmatprep.subr.mxu0 0.0
    %753 = vmatpush1.msra.mxu0 %v520
    %754 = vmatprep.subr.mxu0 0.0
    %755 = vmatpush1.msra.mxu0 %v521
    %756 = vmatprep.subr.mxu0 0.0
    %757 = vmatpush1.msra.mxu0 %v522
    %758 = vmatprep.subr.mxu0 0.0
    %759 = vmatpush1.msra.mxu0 %v523
    %760 = vmatprep.subr.mxu0 0.0
    %761 = vmatpush1.msra.mxu0 %v524
    %762 = vmatprep.subr.mxu0 0.0
    %763 = vmatpush1.msra.mxu0 %v525
    %764 = vmatprep.subr.mxu0 0.0
    %765 = vmatpush1.msra.mxu0 %v526
    %766 = vmatprep.subr.mxu0 0.0
    %767 = vmatpush1.msra.mxu0 %v527
    %768 = vmatprep.subr.mxu0 0.0
    %769 = vmatpush1.msra.mxu0 %v528
    %770 = vmatprep.subr.mxu0 0.0
    %771 = vmatpush1.msra.mxu0 %v529
    %772 = vmatprep.subr.mxu0 0.0
    %773 = vmatpush1.msra.mxu0 %v530
    %774 = vmatprep.mubr.f32.mxu0 %v432
    %775 = vmatmul.mubr.f32.gmra.mrb[0].mxu0 %v431
    %v776 = vpop.f32.mrb[0].mxu0
    %v777 = vadd.f32 %v707, %v776
    %v778 = vpop.f32.mrb[0].mxu0
    %779 = vdwg.mxu0
    %780 = vmatprep.subr.mxu0 0.0
    %781 = vmatpush1.msra.mxu0 %v531
    %782 = vmatprep.subr.mxu0 0.0
    %783 = vmatpush1.msra.mxu0 %v532
    %784 = vmatprep.subr.mxu0 0.0
    %785 = vmatpush1.msra.mxu0 %v533
    %786 = vmatprep.subr.mxu0 0.0
    %787 = vmatpush1.msra.mxu0 %v534
    %788 = vmatprep.subr.mxu0 0.0
    %789 = vmatpush1.msra.mxu0 %v535
    %790 = vmatprep.subr.mxu0 0.0
    %791 = vmatpush1.msra.mxu0 %v536
    %792 = vmatprep.subr.mxu0 0.0
    %793 = vmatpush1.msra.mxu0 %v537
    %794 = vmatprep.subr.mxu0 0.0
    %795 = vmatpush1.msra.mxu0 %v538
    %796 = vmatprep.subr.mxu0 0.0
    %797 = vmatpush1.msra.mxu0 %v539
    %798 = vmatprep.subr.mxu0 0.0
    %799 = vmatpush1.msra.mxu0 %v540
    %800 = vmatprep.subr.mxu0 0.0
    %801 = vmatpush1.msra.mxu0 %v541
    %802 = vmatprep.subr.mxu0 0.0
    %803 = vmatpush1.msra.mxu0 %v542
    %804 = vmatprep.subr.mxu0 0.0
    %805 = vmatpush1.msra.mxu0 %v543
    %806 = vmatprep.subr.mxu0 0.0
    %807 = vmatpush1.msra.mxu0 %v544
    %808 = vmatprep.subr.mxu0 0.0
    %809 = vmatpush1.msra.mxu0 %v545
    %810 = vmatprep.subr.mxu0 0.0
    %811 = vmatpush1.msra.mxu0 %v546
    %812 = vmatprep.subr.mxu0 0.0
    %813 = vmatpush1.msra.mxu0 %v547
    %814 = vmatprep.subr.mxu0 0.0
    %815 = vmatpush1.msra.mxu0 %v548
    %816 = vmatprep.subr.mxu0 0.0
    %817 = vmatpush1.msra.mxu0 %v549
    %818 = vmatprep.subr.mxu0 0.0
    %819 = vmatpush1.msra.mxu0 %v550
    %820 = vmatprep.subr.mxu0 0.0
    %821 = vmatpush1.msra.mxu0 %v551
    %822 = vmatprep.subr.mxu0 0.0
    %823 = vmatpush1.msra.mxu0 %v552
    %824 = vmatprep.subr.mxu0 0.0
    %825 = vmatpush1.msra.mxu0 %v553
    %826 = vmatprep.subr.mxu0 0.0
    %827 = vmatpush1.msra.mxu0 %v554
    %828 = vmatprep.subr.mxu0 0.0
    %829 = vmatpush1.msra.mxu0 %v555
    %830 = vmatprep.subr.mxu0 0.0
    %831 = vmatpush1.msra.mxu0 %v556
    %832 = vmatprep.subr.mxu0 0.0
    %833 = vmatpush1.msra.mxu0 %v557
    %834 = vmatprep.subr.mxu0 0.0
    %835 = vmatpush1.msra.mxu0 %v558
    %836 = vmatprep.subr.mxu0 0.0
    %837 = vmatpush1.msra.mxu0 %v559
    %838 = vmatprep.subr.mxu0 0.0
    %839 = vmatpush1.msra.mxu0 %v560
    %840 = vmatprep.subr.mxu0 0.0
    %841 = vmatpush1.msra.mxu0 %v561
    %842 = vmatprep.subr.mxu0 0.0
    %843 = vmatpush1.msra.mxu0 %v562
    %844 = vmatprep.mubr.f32.mxu0 %v434
    %845 = vmatmul.mubr.f32.gmra.mrb[0].mxu0 %v433
    %v846 = vpop.f32.mrb[0].mxu0
    %v847 = vadd.f32 %v777, %v846
    %v848 = vpop.f32.mrb[0].mxu0
    %849 = vdwg.mxu0
    %850 = vst [vmem:[#allocation5] sm:$0x3] %v847
    // Predicated region
    $region26: #{my_ensemble_forward.1} parent=1 // pred_check
      _
    $region27: #{my_ensemble_forward.1} parent=1 // pred_check_branch
      %852 = sbr.rel (0) target = $region29
    $region28: #{my_ensemble_forward.1} parent=1 // pred_region
      %s854 = ssub.s32 32, 32
      %855 = vsyncadd [#allocation4], %s854
      %s857 = sshll.u32 [#allocation5], 4
      %s858 = int_to_ptr.vmem [resolvable:$true] %s857
      %860 = dma.vmem_to_hbm [thread:$0]  %s858, 32, %s5, [#allocation4]
    $region29: #{my_ensemble_forward.1} parent=1 // pred_fallthru
      _
    // Predicated region
    $region30: #{my_ensemble_forward.1} parent=1 // pred_check
      _
    $region31: #{my_ensemble_forward.1} parent=1 // pred_check_branch
      %862 = sbr.rel (0) target = $region33
    $region32: #{my_ensemble_forward.1} parent=1 // pred_region
      %863 = dma.done [#allocation4], 32
    $region33: #{my_ensemble_forward.1} parent=1 // pred_fallthru
      _
    %864 = vsyncpa [#allocation3], 1
    %865 = vsyncpa [#allocation4], 1

</llo_original>
